<compile_context>
chip_gen: v7x
topology: tpu7x:2x2x1
jax: 0.10.0
libtpu: 0.0.40
codegen_flags: <defaults>
</compile_context>

<pallas_src>
import jax
import jax.numpy as jnp
from jax.experimental import pallas as pl
from jax.experimental.pallas import tpu as pltpu


def _relu_kernel(x_ref, o_ref):
    # Elementwise max(x, 0) on the current VMEM tile (single VPU op).
    o_ref[...] = jnp.maximum(x_ref[...], jnp.zeros((), x_ref.dtype))


# Below this size a single fused jnp.maximum beats pallas_call launch + DMA setup.
_SMALL_INPUT_BYTES = 128 * 1024
# Largest lane-dense width tried when re-viewing the flat data.
_MAX_LANE_WIDTH = 2048


def _target_block_bytes() -> int:
    """Per-generation VMEM block target (bytes) for this streaming kernel."""
    try:
        kind = jax.devices()[0].device_kind.lower()
    except Exception:  # pragma: no cover - defensive; never fatal
        kind = ""
    if "v7" in kind:
        # v7x: 3.2 TB/s HBM makes steps short; bigger blocks amortize the
        # fixed per-step overhead.  8 MiB x 2 arrays x 2 buffers = 32 MiB.
        return 8 * 1024 * 1024
    # v5e/v6e: ~85-86% of HBM roofline is already reached around 1-4 MiB.
    return 4 * 1024 * 1024


def _lane_dense_view(total: int):
    """Largest width (multiple of 128, <= _MAX_LANE_WIDTH) dividing `total`."""
    for width in range(_MAX_LANE_WIDTH, 127, -128):
        if total % width == 0:
            return total // width, width
    return None


def relu_pallas(x: jax.Array) -> jax.Array:
    """Elementwise ReLU over a 2-D (num_points, channels) feature tensor."""
    assert x.ndim == 2, "expected (num_points, channels) features"
    n, c = x.shape
    total = n * c
    itemsize = jnp.dtype(x.dtype).itemsize

    # Small-input fast path: let XLA fuse it; the kernel only pays off on
    # large point clouds.
    if total == 0 or total * itemsize < _SMALL_INPUT_BYTES:
        return jnp.maximum(x, jnp.zeros((), x.dtype))

    view = _lane_dense_view(total)
    if view is None:
        # No multiple-of-128 divisor at all (pathological element count): a
        # narrow-lane BlockSpec would lower to masked partial stores, so the
        # fused XLA maximum is at least as fast.  Never present <128 lanes.
        return jnp.maximum(x, jnp.zeros((), x.dtype))
    rows, width = view

    # Lane-dense 2-D view of the same contiguous data (free layout plumbing
    # for an elementwise op).
    x2 = x.reshape(rows, width)

    # Row-tile granularity = dtype's native sublane packing:
    # 8 rows for f32, 16 for bf16/f16, 32 for int8/fp8.
    sublane = 8 * max(1, 4 // itemsize)

    block_bytes = _target_block_bytes()
    tn = max(sublane, (block_bytes // (width * itemsize)) // sublane * sublane)
    # Ensure >= 2 grid steps so the parallel axis can shard across both v7x
    # TensorCores (above the small-input threshold rows >= 2*sublane always).
    if rows >= 2 * sublane:
        tn = min(tn, max(sublane, (rows // 2) // sublane * sublane))
    tn = min(tn, rows)
    grid = (pl.cdiv(rows, tn),)

    # Scoped-VMEM budget: in + out, double-buffered, plus headroom.  Stays
    # under v7x's 64 MiB physical VMEM and above v5e's 16 MiB default.
    vmem_limit = min(48 * 1024 * 1024,
                     4 * tn * width * itemsize + 16 * 1024 * 1024)

    out = pl.pallas_call(
        _relu_kernel,
        out_shape=jax.ShapeDtypeStruct((rows, width), x.dtype),
        grid_spec=pltpu.PrefetchScalarGridSpec(
            num_scalar_prefetch=0,
            grid=grid,
            # NOTE: pipeline_mode=pl.Buffered(3) is a possible low-single-digit
            # win for very large inputs; left at the default pending measurement.
            in_specs=[pl.BlockSpec((tn, width), lambda i: (i, 0))],
            out_specs=pl.BlockSpec((tn, width), lambda i: (i, 0)),
        ),
        compiler_params=pltpu.CompilerParams(
            dimension_semantics=("parallel",),
            vmem_limit_bytes=vmem_limit,
        ),
        cost_estimate=pl.CostEstimate(
            flops=total,
            transcendentals=0,
            bytes_accessed=2 * total * itemsize,
        ),
        # In-place when the caller donates the buffer; XLA copies otherwise.
        input_output_aliases={0: 0},
    )(x2)

    return out.reshape(n, c)


if __name__ == "__main__":
    key = jax.random.PRNGKey(0)

    # Small point cloud: 1024 points x 96 channels (384 KiB f32) — big enough
    # to take the Pallas path and exercise the lane-dense reshape
    # (1024*96 -> (48, 2048)) with a 2-step parallel grid.
    features = jax.random.normal(key, (1024, 96), dtype=jnp.float32)
    out = relu_pallas(features)
    jax.block_until_ready(out)
    ref = jnp.maximum(features, 0.0)
    assert out.shape == features.shape and out.dtype == features.dtype
    assert bool(jnp.allclose(out, ref)), "ReLU kernel mismatch (f32)"

    # bf16 features exercise the 16-row packed-sublane tile granularity.
    feats_bf16 = jax.random.normal(jax.random.PRNGKey(1), (2048, 64),
                                   dtype=jnp.bfloat16)
    out_bf16 = relu_pallas(feats_bf16)
    jax.block_until_ready(out_bf16)
    assert bool(jnp.array_equal(out_bf16, jnp.maximum(feats_bf16, 0))), \
        "ReLU kernel mismatch (bf16)"

    # Tiny input exercises the fused fast path (no kernel launch).
    small = jax.random.normal(jax.random.PRNGKey(2), (64, 32), dtype=jnp.float32)
    out_small = relu_pallas(small)
    jax.block_until_ready(out_small)
    assert bool(jnp.allclose(out_small, jnp.maximum(small, 0.0))), \
        "ReLU fast-path mismatch"

    # Element count with no multiple-of-128 divisor exercises the XLA fallback.
    ragged = jax.random.normal(jax.random.PRNGKey(3), (1001, 96), dtype=jnp.float32)
    out_ragged = relu_pallas(ragged)
    jax.block_until_ready(out_ragged)
    assert bool(jnp.allclose(out_ragged, jnp.maximum(ragged, 0.0))), \
        "ReLU ragged-fallback mismatch"

    print("KERNEL_OK")
</pallas_src>

<mosaic_0001>
module attributes {stable_mosaic.version = 11 : i64} {
  func.func @_relu_kernel(%arg0: i32, %arg1: memref<24x2048xf32, #tpu.memory_space<vmem>>, %arg2: memref<24x2048xf32, #tpu.memory_space<vmem>>) attributes {dimension_semantics = [#tpu.dimension_semantics<parallel>], iteration_bounds = array<i64: 2>, scalar_prefetch = 0 : i64, scratch_operands = 0 : i64, tpu.core_type = #tpu.core_type<tc>, window_params = [{transform_indices = @transform_0, window_bounds = array<i64: 24, 2048>}, {transform_indices = @transform_1, window_bounds = array<i64: 24, 2048>}]} {
    %c0 = arith.constant 0 : index
    %c0_0 = arith.constant 0 : index
    %0 = vector.load %arg1[%c0, %c0_0] : memref<24x2048xf32, #tpu.memory_space<vmem>>, vector<24x2048xf32>
    %cst = arith.constant 0.000000e+00 : f32
    %1 = vector.broadcast %cst : f32 to vector<24x2048xf32>
    %2 = arith.maximumf %0, %1 : vector<24x2048xf32>
    %c0_1 = arith.constant 0 : index
    %c0_2 = arith.constant 0 : index
    %3 = vector.load %arg2[%c0_1, %c0_2] : memref<24x2048xf32, #tpu.memory_space<vmem>>, vector<24x2048xf32>
    tpu.vector_store %arg2[%c0_1, %c0_2], %2 {strides = array<i32>} : memref<24x2048xf32, #tpu.memory_space<vmem>>, vector<24x2048xf32>,
    return
  }
  func.func @transform_0(%arg0: i32) -> (i32, i32) {
    %c0_i32 = arith.constant 0 : i32
    %c0_i32_0 = arith.constant 0 : i32
    return %arg0, %c0_i32 : i32, i32
  }
  func.func @transform_1(%arg0: i32) -> (i32, i32) {
    %c0_i32 = arith.constant 0 : i32
    %c0_i32_0 = arith.constant 0 : i32
    return %arg0, %c0_i32 : i32, i32
  }
}

</mosaic_0001>

<llo_original>
// kernel: tpu_custom_call.1
$region0: #{tpu_custom_call.1}
  #allocation0 [shape = 'u32[]', space=smem, size = 0x4, offset = 0x4, fixed_abs, tag = 'smem constant byte address 0x4 - core index']
  #allocation1 [shape = 'u32[144,128]{1,0:T(1,128)}', space=vmem, size = 0x12000, scoped, tag = 'internal scratch']
  %s0 = inlined_call_operand.hbm [shape: f32[48,2048], index: 0, kind: input, shape index: {}, may-alias: {0,1}]
  %s1 = inlined_call_operand.hbm [shape: f32[48,2048], index: 1, kind: output, shape index: {}, may-alias: {0,1}]
  %s2 = sld [smem:[#allocation0]]
  $region41: #{tpu_custom_call.1} parent=0
    _
  %s4 = ssub.s32 1, %s2
  %s5 = scalar_select 0, %s4, %s2
  $region1: #{tpu_custom_call.1} parent=0
    #allocation2 [shape = 'u8[393216]{0}', space=vmem, size = 0x60000, scoped, tag = 'input window, operand 0']
    #allocation3 [shape = 's32[2]{0}', space=sflag, size = 0x8, scoped, tag = 'scoped memory for tpu_custom_call.1']
    #allocation4 [shape = 's32[2]{0}', space=sflag, size = 0x8, scoped, tag = 'scoped memory for tpu_custom_call.1']
    #allocation5 [shape = 'u8[393216]{0}', space=vmem, size = 0x60000, scoped, tag = 'output window, operand 0']
    %6 = vsyncpa [#allocation3], 0
    %s7 = scalar_lea.sflag [#allocation3], 1
    %8 = vsyncpa %s7, 0
    %9 = vsyncpa [#allocation4], 0
    %s10 = scalar_lea.sflag [#allocation4], 1
    %11 = vsyncpa %s10, 0
    loop: start=0, step=1, limit=4
    $region2: #{tpu_custom_call.1} parent=1 // loop_pre_header
      _
    $region3: #{tpu_custom_call.1} parent=1 // loop_header
      %s13 = sphi 0, %s17
      %p14 = scmp.ge.s32.totalorder %s13, 4
      %s23 = sphi 0, %s25
      %s26 = sphi 0, %s23
      %s27 = sphi 0, %s26
      %s43 = sphi 0, %s27
      %s49 = sphi 0, %s51
      %s52 = sphi 0, %s49
      %s53 = sphi 0, %s52
      %s69 = sphi 0, %s53
    $region4: #{tpu_custom_call.1} parent=1 // loop_header_branch
      %16 = sbr.rel (%p14) target = $region8
    $region5: #{tpu_custom_call.1} parent=1 // loop_body
      %s18 = ssub.s32 %s13, 1
      %s19 = ssub.s32 %s13, 2
      %s20 = sadd.s32 %s13, 1
      %s21 = ssub.s32 %s13, %s20
      %p22 = scmp.eq.s32.totalorder %s21, 0
      %s24 = sadd.s32 %s23, 1
      %s25 = scalar_select %p22, %s23, %s24
      %p28 = pneg %p22
      %p29 = scmp.eq.s32.totalorder %s13, 1
      %p30 = por %p28, %p29
      %p31 = scmp.ne.s32.totalorder %s23, %s26
      %p32 = scmp.eq.s32.totalorder %s13, 0
      %p33 = por %p31, %p32
      %p34 = scmp.ne.s32.totalorder %s23, %s26
      %p35 = scmp.eq.s32.totalorder %s18, 1
      %p36 = por %p34, %p35
      %p37 = scmp.ne.s32.totalorder %s26, %s27
      %p38 = scmp.eq.s32.totalorder %s18, 0
      %p39 = por %p37, %p38
      %p40 = scmp.ne.s32.totalorder %s26, %s27
      %p41 = scmp.eq.s32.totalorder %s19, 1
      %p42 = por %p40, %p41
      %p44 = scmp.ne.s32.totalorder %s27, %s43
      %p45 = scmp.eq.s32.totalorder %s19, 0
      %p46 = por %p44, %p45
      %s47 = ssub.s32 %s13, %s20
      %p48 = scmp.eq.s32.totalorder %s47, 0
      %s50 = sadd.s32 %s49, 1
      %s51 = scalar_select %p48, %s49, %s50
      %p54 = pneg %p48
      %p55 = scmp.eq.s32.totalorder %s13, 1
      %p56 = por %p54, %p55
      %p57 = scmp.ne.s32.totalorder %s49, %s52
      %p58 = scmp.eq.s32.totalorder %s13, 0
      %p59 = por %p57, %p58
      %p60 = scmp.ne.s32.totalorder %s49, %s52
      %p61 = scmp.eq.s32.totalorder %s18, 1
      %p62 = por %p60, %p61
      %p63 = scmp.ne.s32.totalorder %s52, %s53
      %p64 = scmp.eq.s32.totalorder %s18, 0
      %p65 = por %p63, %p64
      %p66 = scmp.ne.s32.totalorder %s52, %s53
      %p67 = scmp.eq.s32.totalorder %s19, 1
      %p68 = por %p66, %p67
      %p70 = scmp.ne.s32.totalorder %s53, %s69
      %p71 = scmp.eq.s32.totalorder %s19, 0
      %p72 = por %p70, %p71
      %p73 = scmp.le.s32.totalorder 1, %s13
      %p74 = scmp.lt.s32.totalorder %s13, 3
      %p75 = pnand %p73, %p74
      %p76 = pneg %p75
      // Predicated region
      $region9: #{tpu_custom_call.1} parent=5 // pred_check
        _
      $region10: #{tpu_custom_call.1} parent=5 // pred_check_branch
        %78 = sbr.rel (%p75) target = $region12
      $region11: #{tpu_custom_call.1} parent=5 // pred_region
        %s79 = ssub.s32 %s13, 1
      $region12: #{tpu_custom_call.1} parent=5 // pred_fallthru
        _
      %p80 = scmp.lt.s32.totalorder %s13, 2
      // Predicated region
      $region13: #{tpu_custom_call.1} parent=5 // pred_check
        %p81 = pneg %p80
      $region14: #{tpu_custom_call.1} parent=5 // pred_check_branch
        %83 = sbr.rel (%p81) target = $region16
      $region15: #{tpu_custom_call.1} parent=5 // pred_region
        // Predicated region
        $region17: #{tpu_custom_call.1} parent=15 // pred_check
          %p84 = pneg %p33
        $region18: #{tpu_custom_call.1} parent=15 // pred_check_branch
          %86 = sbr.rel (%p84) target = $region20
        $region19: #{tpu_custom_call.1} parent=15 // pred_region
          %s87 = sand.u32 %s23, 1
          %s88 = scalar_lea.sflag [#allocation3], %s87
          %s89 = sand.u32 %s23, 1
          %s90 = smul.addr %s89, 384
          %s91 = scalar_lea.vmem [#allocation2], %s90
          %s92 = smul.u32 3, %s13
          %s94 = ssub.s32 6144, 6144
          %95 = vsyncadd %s88, %s94
          %s96 = smul.addr %s92, 16
          %s97 = smul.addr %s96, 128
          %s98 = scalar_lea.hbm %s0, %s97
          %s99 = sshll.u32 %s91, 4
          %s100 = int_to_ptr.vmem [resolvable:$true] %s99
          %105 = dma.hbm_to_vmem [thread:$0]  %s98, 6144, %s100, %s88, 2048, 2048, 128
        $region20: #{tpu_custom_call.1} parent=15 // pred_fallthru
          _
      $region16: #{tpu_custom_call.1} parent=5 // pred_fallthru
        _
      %p106 = scmp.le.s32.totalorder 1, %s13
      %p107 = scmp.lt.s32.totalorder %s13, 3
      %p108 = pnand %p106, %p107
      %p109 = pneg %p108
      // Predicated region
      $region21: #{tpu_custom_call.1} parent=5 // pred_check
        _
      $region22: #{tpu_custom_call.1} parent=5 // pred_check_branch
        %111 = sbr.rel (%p108) target = $region24
      $region23: #{tpu_custom_call.1} parent=5 // pred_region
        %s112 = ssub.s32 %s13, 1
        %s113 = sand.u32 %s26, 1
        %s114 = scalar_lea.sflag [#allocation3], %s113
        %s115 = sand.u32 %s26, 1
        %s116 = smul.addr %s115, 384
        %s117 = scalar_lea.vmem [#allocation2], %s116
        // Predicated region
        $region25: #{tpu_custom_call.1} parent=23 // pred_check
          %p118 = pneg %p39
        $region26: #{tpu_custom_call.1} parent=23 // pred_check_branch
          %120 = sbr.rel (%p118) target = $region28
        $region27: #{tpu_custom_call.1} parent=23 // pred_region
          %121 = dma.done %s114, 6144
        $region28: #{tpu_custom_call.1} parent=23 // pred_fallthru
          _
        %s122 = sand.u32 %s26, 1
        %s123 = scalar_lea.sflag [#allocation3], %s122
        %s124 = sand.u32 %s26, 1
        %s125 = smul.addr %s124, 384
        %s126 = scalar_lea.vmem [#allocation2], %s125
        %p127 = pneg %p39
        %p128 = pneg %p36
        %p129 = pneg %p65
        %p130 = pneg %p62
        %s131 = sand.u32 %s52, 1
        %s132 = scalar_lea.sflag [#allocation4], %s131
        %s133 = sand.u32 %s52, 1
        %s134 = smul.addr %s133, 384
        %s135 = scalar_lea.vmem [#allocation5], %s134
        %s136 = smul.u32 3, %s18
        %s137 = smul.u32 3, %s18
        %v138 = vld [vmem:[%s117] sm:$0xff]
        %v139 = vld [vmem:[%s117 + $0x8] sm:$0xff]
        %v140 = vld [vmem:[%s117 + $0x10] sm:$0xff]
        %v141 = vld [vmem:[%s117 + $0x18] sm:$0xff]
        %v142 = vld [vmem:[%s117 + $0x20] sm:$0xff]
        %v143 = vld [vmem:[%s117 + $0x28] sm:$0xff]
        %v144 = vld [vmem:[%s117 + $0x30] sm:$0xff]
        %v145 = vld [vmem:[%s117 + $0x38] sm:$0xff]
        %v146 = vld [vmem:[%s117 + $0x40] sm:$0xff]
        %v147 = vld [vmem:[%s117 + $0x48] sm:$0xff]
        %v148 = vld [vmem:[%s117 + $0x50] sm:$0xff]
        %v149 = vld [vmem:[%s117 + $0x58] sm:$0xff]
        %v150 = vld [vmem:[%s117 + $0x60] sm:$0xff]
        %v151 = vld [vmem:[%s117 + $0x68] sm:$0xff]
        %v152 = vld [vmem:[%s117 + $0x70] sm:$0xff]
        %v153 = vld [vmem:[%s117 + $0x78] sm:$0xff]
        %v154 = vld [vmem:[%s117 + $0x80] sm:$0xff]
        %v155 = vld [vmem:[%s117 + $0x88] sm:$0xff]
        %v156 = vld [vmem:[%s117 + $0x90] sm:$0xff]
        %v157 = vld [vmem:[%s117 + $0x98] sm:$0xff]
        %v158 = vld [vmem:[%s117 + $0xa0] sm:$0xff]
        %v159 = vld [vmem:[%s117 + $0xa8] sm:$0xff]
        %v160 = vld [vmem:[%s117 + $0xb0] sm:$0xff]
        %v161 = vld [vmem:[%s117 + $0xb8] sm:$0xff]
        %v162 = vld [vmem:[%s117 + $0xc0] sm:$0xff]
        %v163 = vld [vmem:[%s117 + $0xc8] sm:$0xff]
        %v164 = vld [vmem:[%s117 + $0xd0] sm:$0xff]
        %v165 = vld [vmem:[%s117 + $0xd8] sm:$0xff]
        %v166 = vld [vmem:[%s117 + $0xe0] sm:$0xff]
        %v167 = vld [vmem:[%s117 + $0xe8] sm:$0xff]
        %v168 = vld [vmem:[%s117 + $0xf0] sm:$0xff]
        %v169 = vld [vmem:[%s117 + $0xf8] sm:$0xff]
        %v170 = vld [vmem:[%s117 + $0x100] sm:$0xff]
        %v171 = vld [vmem:[%s117 + $0x108] sm:$0xff]
        %v172 = vld [vmem:[%s117 + $0x110] sm:$0xff]
        %v173 = vld [vmem:[%s117 + $0x118] sm:$0xff]
        %v174 = vld [vmem:[%s117 + $0x120] sm:$0xff]
        %v175 = vld [vmem:[%s117 + $0x128] sm:$0xff]
        %v176 = vld [vmem:[%s117 + $0x130] sm:$0xff]
        %v177 = vld [vmem:[%s117 + $0x138] sm:$0xff]
        %v178 = vld [vmem:[%s117 + $0x140] sm:$0xff]
        %v179 = vld [vmem:[%s117 + $0x148] sm:$0xff]
        %v180 = vld [vmem:[%s117 + $0x150] sm:$0xff]
        %v181 = vld [vmem:[%s117 + $0x158] sm:$0xff]
        %v182 = vld [vmem:[%s117 + $0x160] sm:$0xff]
        %v183 = vld [vmem:[%s117 + $0x168] sm:$0xff]
        %v184 = vld [vmem:[%s117 + $0x170] sm:$0xff]
        %v185 = vld [vmem:[%s117 + $0x178] sm:$0xff]
        %v186 = vmax.f32 %v138, 0.0
        %v187 = vmax.f32 %v139, 0.0
        %v188 = vmax.f32 %v140, 0.0
        %v189 = vmax.f32 %v141, 0.0
        %v190 = vmax.f32 %v142, 0.0
        %v191 = vmax.f32 %v143, 0.0
        %v192 = vmax.f32 %v144, 0.0
        %v193 = vmax.f32 %v145, 0.0
        %v194 = vmax.f32 %v146, 0.0
        %v195 = vmax.f32 %v147, 0.0
        %v196 = vmax.f32 %v148, 0.0
        %v197 = vmax.f32 %v149, 0.0
        %v198 = vmax.f32 %v150, 0.0
        %v199 = vmax.f32 %v151, 0.0
        %v200 = vmax.f32 %v152, 0.0
        %v201 = vmax.f32 %v153, 0.0
        %v202 = vmax.f32 %v154, 0.0
        %v203 = vmax.f32 %v155, 0.0
        %v204 = vmax.f32 %v156, 0.0
        %v205 = vmax.f32 %v157, 0.0
        %v206 = vmax.f32 %v158, 0.0
        %v207 = vmax.f32 %v159, 0.0
        %v208 = vmax.f32 %v160, 0.0
        %v209 = vmax.f32 %v161, 0.0
        %v210 = vmax.f32 %v162, 0.0
        %v211 = vmax.f32 %v163, 0.0
        %v212 = vmax.f32 %v164, 0.0
        %v213 = vmax.f32 %v165, 0.0
        %v214 = vmax.f32 %v166, 0.0
        %v215 = vmax.f32 %v167, 0.0
        %v216 = vmax.f32 %v168, 0.0
        %v217 = vmax.f32 %v169, 0.0
        %v218 = vmax.f32 %v170, 0.0
        %v219 = vmax.f32 %v171, 0.0
        %v220 = vmax.f32 %v172, 0.0
        %v221 = vmax.f32 %v173, 0.0
        %v222 = vmax.f32 %v174, 0.0
        %v223 = vmax.f32 %v175, 0.0
        %v224 = vmax.f32 %v176, 0.0
        %v225 = vmax.f32 %v177, 0.0
        %v226 = vmax.f32 %v178, 0.0
        %v227 = vmax.f32 %v179, 0.0
        %v228 = vmax.f32 %v180, 0.0
        %v229 = vmax.f32 %v181, 0.0
        %v230 = vmax.f32 %v182, 0.0
        %v231 = vmax.f32 %v183, 0.0
        %v232 = vmax.f32 %v184, 0.0
        %v233 = vmax.f32 %v185, 0.0
        %234 = vst [vmem:[%s135] sm:$0xff] %v186
        %235 = vst [vmem:[%s135 + $0x8] sm:$0xff] %v187
        %236 = vst [vmem:[%s135 + $0x10] sm:$0xff] %v188
        %237 = vst [vmem:[%s135 + $0x18] sm:$0xff] %v189
        %238 = vst [vmem:[%s135 + $0x20] sm:$0xff] %v190
        %239 = vst [vmem:[%s135 + $0x28] sm:$0xff] %v191
        %240 = vst [vmem:[%s135 + $0x30] sm:$0xff] %v192
        %241 = vst [vmem:[%s135 + $0x38] sm:$0xff] %v193
        %242 = vst [vmem:[%s135 + $0x40] sm:$0xff] %v194
        %243 = vst [vmem:[%s135 + $0x48] sm:$0xff] %v195
        %244 = vst [vmem:[%s135 + $0x50] sm:$0xff] %v196
        %245 = vst [vmem:[%s135 + $0x58] sm:$0xff] %v197
        %246 = vst [vmem:[%s135 + $0x60] sm:$0xff] %v198
        %247 = vst [vmem:[%s135 + $0x68] sm:$0xff] %v199
        %248 = vst [vmem:[%s135 + $0x70] sm:$0xff] %v200
        %249 = vst [vmem:[%s135 + $0x78] sm:$0xff] %v201
        %250 = vst [vmem:[%s135 + $0x80] sm:$0xff] %v202
        %251 = vst [vmem:[%s135 + $0x88] sm:$0xff] %v203
        %252 = vst [vmem:[%s135 + $0x90] sm:$0xff] %v204
        %253 = vst [vmem:[%s135 + $0x98] sm:$0xff] %v205
        %254 = vst [vmem:[%s135 + $0xa0] sm:$0xff] %v206
        %255 = vst [vmem:[%s135 + $0xa8] sm:$0xff] %v207
        %256 = vst [vmem:[%s135 + $0xb0] sm:$0xff] %v208
        %257 = vst [vmem:[%s135 + $0xb8] sm:$0xff] %v209
        %258 = vst [vmem:[%s135 + $0xc0] sm:$0xff] %v210
        %259 = vst [vmem:[%s135 + $0xc8] sm:$0xff] %v211
        %260 = vst [vmem:[%s135 + $0xd0] sm:$0xff] %v212
        %261 = vst [vmem:[%s135 + $0xd8] sm:$0xff] %v213
        %262 = vst [vmem:[%s135 + $0xe0] sm:$0xff] %v214
        %263 = vst [vmem:[%s135 + $0xe8] sm:$0xff] %v215
        %264 = vst [vmem:[%s135 + $0xf0] sm:$0xff] %v216
        %265 = vst [vmem:[%s135 + $0xf8] sm:$0xff] %v217
        %266 = vst [vmem:[%s135 + $0x100] sm:$0xff] %v218
        %267 = vst [vmem:[%s135 + $0x108] sm:$0xff] %v219
        %268 = vst [vmem:[%s135 + $0x110] sm:$0xff] %v220
        %269 = vst [vmem:[%s135 + $0x118] sm:$0xff] %v221
        %270 = vst [vmem:[%s135 + $0x120] sm:$0xff] %v222
        %271 = vst [vmem:[%s135 + $0x128] sm:$0xff] %v223
        %272 = vst [vmem:[%s135 + $0x130] sm:$0xff] %v224
        %273 = vst [vmem:[%s135 + $0x138] sm:$0xff] %v225
        %274 = vst [vmem:[%s135 + $0x140] sm:$0xff] %v226
        %275 = vst [vmem:[%s135 + $0x148] sm:$0xff] %v227
        %276 = vst [vmem:[%s135 + $0x150] sm:$0xff] %v228
        %277 = vst [vmem:[%s135 + $0x158] sm:$0xff] %v229
        %278 = vst [vmem:[%s135 + $0x160] sm:$0xff] %v230
        %279 = vst [vmem:[%s135 + $0x168] sm:$0xff] %v231
        %280 = vst [vmem:[%s135 + $0x170] sm:$0xff] %v232
        %281 = vst [vmem:[%s135 + $0x178] sm:$0xff] %v233
        %s282 = sand.u32 %s52, 1
        %s283 = scalar_lea.sflag [#allocation4], %s282
        %s284 = sand.u32 %s52, 1
        %s285 = smul.addr %s284, 384
        %s286 = scalar_lea.vmem [#allocation5], %s285
        // Predicated region
        $region29: #{tpu_custom_call.1} parent=23 // pred_check
          %p287 = pneg %p62
        $region30: #{tpu_custom_call.1} parent=23 // pred_check_branch
          %289 = sbr.rel (%p287) target = $region32
        $region31: #{tpu_custom_call.1} parent=23 // pred_region
          %s290 = smul.u32 3, %s18
          %s292 = ssub.s32 6144, 6144
          %293 = vsyncadd %s283, %s292
          %s294 = smul.addr %s290, 16
          %s295 = smul.addr %s294, 128
          %s296 = scalar_lea.hbm %s1, %s295
          %s297 = sshll.u32 %s286, 4
          %s298 = int_to_ptr.vmem [resolvable:$true] %s297
          %303 = dma.vmem_to_hbm [thread:$0]  %s298, 6144, %s296, %s283, 2048, 2048, 128
        $region32: #{tpu_custom_call.1} parent=23 // pred_fallthru
          _
      $region24: #{tpu_custom_call.1} parent=5 // pred_fallthru
        _
      %p304 = scmp.le.s32.totalorder 2, %s13
      // Predicated region
      $region33: #{tpu_custom_call.1} parent=5 // pred_check
        %p305 = pneg %p304
      $region34: #{tpu_custom_call.1} parent=5 // pred_check_branch
        %307 = sbr.rel (%p305) target = $region36
      $region35: #{tpu_custom_call.1} parent=5 // pred_region
        %s308 = ssub.s32 %s13, 2
        // Predicated region
        $region37: #{tpu_custom_call.1} parent=35 // pred_check
          %p309 = pneg %p68
        $region38: #{tpu_custom_call.1} parent=35 // pred_check_branch
          %311 = sbr.rel (%p309) target = $region40
        $region39: #{tpu_custom_call.1} parent=35 // pred_region
          %s312 = sand.u32 %s53, 1
          %s313 = scalar_lea.sflag [#allocation4], %s312
          %s314 = sand.u32 %s53, 1
          %s315 = smul.addr %s314, 384
          %s316 = scalar_lea.vmem [#allocation5], %s315
          %317 = dma.done %s313, 6144
        $region40: #{tpu_custom_call.1} parent=35 // pred_fallthru
          _
      $region36: #{tpu_custom_call.1} parent=5 // pred_fallthru
        _
    $region6: #{tpu_custom_call.1} parent=1 // loop_footer
      %s17 = sadd.s32 1, %s13
    $region7: #{tpu_custom_call.1} parent=1 // loop_footer_branch
      %12 = sbr.rel target = $region3
    $region8: #{tpu_custom_call.1} parent=1 // loop_exit
      _
    %318 = vsyncpa [#allocation3], 1
    %s319 = scalar_lea.sflag [#allocation3], 1
    %320 = vsyncpa %s319, 1
    %321 = vsyncpa [#allocation4], 1
    %s322 = scalar_lea.sflag [#allocation4], 1
    %323 = vsyncpa %s322, 1

</llo_original>
